<compile_context>
chip_gen: v7x
topology: tpu7x:2x2x1
jax: 0.10.0
libtpu: 0.0.40
codegen_flags: <defaults>
</compile_context>

<pallas_src>
import functools
import math

import jax
import jax.numpy as jnp
from jax.experimental import pallas as pl
from jax.experimental.pallas import tpu as pltpu


def _laplacian_nll_kernel(*refs, has_mask, want_loss, want_sum, tile_acc,
                          log_eps_min, log_eps_max):
    yhat_ref, logsc_ref, tgt_ref = refs[0], refs[1], refs[2]
    pos = 3
    mask_ref = None
    if has_mask:
        mask_ref = refs[pos]
        pos += 1
    loss_ref = None
    if want_loss:
        loss_ref = refs[pos]
        pos += 1
    psum_ref = None
    if want_sum:
        psum_ref = refs[pos]
        pos += 1

    yhat = yhat_ref[...].astype(jnp.float32)
    log_scale = logsc_ref[...].astype(jnp.float32)
    tgt = tgt_ref[...].astype(jnp.float32)

    # Clamp in log-space: clip(exp(x), a, b) == exp(clip(x, log a, log b)),
    # removing the log(exp(.)) round-trip of the reference formulation.
    log_scale = jnp.clip(log_scale, log_eps_min, log_eps_max)
    scale = jnp.exp(log_scale)
    loss = log_scale + jnp.abs(yhat - tgt) / scale

    if has_mask:
        # mask block is (1, tk) or same shape as loss; broadcast on the VPU.
        loss = loss * mask_ref[...].astype(jnp.float32)

    if want_loss:
        loss_ref[...] = loss.astype(loss_ref.dtype)

    if want_sum:
        if tile_acc:
            # Flat path: loss is (tm, 128) with tm % 8 == 0.  The reshape is a
            # pure sublane-group split (no relayout) and the fold is plain
            # vreg adds that hide under the DMA — no cross-lane XLU reduce or
            # scalar broadcast per step.
            psum_ref[...] = loss.reshape(-1, 8, 128).sum(axis=0)
        else:
            # Structured (broadcast-mask) path: one cross-lane reduce per
            # (large) block, placed at element [0, 0] of the partial block.
            s = jnp.sum(loss)
            rows = jax.lax.broadcasted_iota(jnp.int32, (8, 128), 0)
            cols = jax.lax.broadcasted_iota(jnp.int32, (8, 128), 1)
            psum_ref[...] = jnp.where((rows == 0) & (cols == 0), s,
                                      jnp.zeros((8, 128), jnp.float32))


def _sublane_unit(*dtypes):
    """Native sublane packing unit: 8 for 32-bit, 16 for bf16, 32 for 8-bit."""
    u = 8
    for dt in dtypes:
        itemsize = jnp.dtype(dt).itemsize
        u = max(u, 8 * max(1, 4 // max(itemsize, 1)))
    return u


def _pick_tile(dim, unit, cap):
    """Largest multiple of `unit` dividing `dim`, <= cap (>= unit).
    Returns `dim` itself if `dim` is not a multiple of `unit` (the block then
    spans the full axis, which the (8,128) rule allows)."""
    if dim % unit != 0:
        return dim
    t = (max(unit, min(dim, cap)) // unit) * unit
    while t > unit:
        if dim % t == 0:
            return t
        t -= unit
    return unit


def _vmem_plan(n_streams):
    """Per-generation VMEM budgeting -> (vmem_limit_bytes, block_elems_f32)."""
    try:
        phys = int(getattr(pltpu.get_tpu_info(), "vmem_capacity_bytes", 0))
    except Exception:
        phys = 0
    if phys <= 0:
        phys = 64 * 1024 * 1024                  # conservative: assume v7x
    if phys >= 100 * 1024 * 1024:                # v5e / v6e: 128 MiB physical
        limit = 64 * 1024 * 1024
    else:                                        # v7x: 64 MiB physical
        limit = 48 * 1024 * 1024
    # Each streamed operand is double-buffered; keep ~25% headroom for the
    # (8,128) psum blocks, semaphores and compiler scratch.
    block_bytes = (limit * 3 // 4) // (2 * max(n_streams, 1))
    block_bytes = max(64 * 1024, min(8 * 1024 * 1024, block_bytes))
    return limit, block_bytes // 4


def laplacian_nll(input, target, mask=None, reduce_mean=True,
                  eps_min=1e-5, eps_max=1000.0):
    """JAX/Pallas equivalent of LaplacianNLL.forward.

    input : (B, 2*C, H, W)   -- [mean | log_scale] stacked on the channel axis
    target: (B, C, H, W)
    mask  : optional (B, 1, H, W) (a (B, C, H, W) mask is also accepted)
    """
    B, C2, H, W = input.shape
    assert C2 % 2 == 0, "channel dim must hold 2 params per channel"
    C = C2 // 2
    assert target.shape == (B, C, H, W)
    K = H * W
    M = C * K

    want_loss = not reduce_mean
    want_sum = reduce_mean
    has_mask = mask is not None

    mask_bcast = False
    Cm = None
    if has_mask:
        Bm, Cm = mask.shape[0], mask.shape[1]
        assert Bm == B and Cm in (1, C) and mask.shape[2:] == (H, W)
        mask_bcast = (Cm == 1 and C > 1)

    dts = [input.dtype, target.dtype] + ([mask.dtype] if has_mask else [])
    unit = _sublane_unit(*dts)                       # dtype-aware sublane unit

    n_streams = 3 + (1 if has_mask else 0) + (1 if want_loss else 0)
    vmem_limit, target_elems = _vmem_plan(n_streams)

    kernel_kwargs = dict(
        has_mask=has_mask, want_loss=want_loss, want_sum=want_sum,
        log_eps_min=math.log(eps_min), log_eps_max=math.log(eps_max))

    # Flat layout is usable whenever the mask does not need a per-channel
    # broadcast inside the kernel and the flattened extent tiles natively.
    flat_ok = (not mask_bcast) and (M % (unit * 128) == 0)

    in_specs, inputs, out_shapes, out_specs = [], [], [], []

    if flat_ok:
        # ---- flat path: sublane dim comes from the flattened C*H*W axis ----
        R = M // 128
        tm = _pick_tile(R, unit, max(unit, target_elems // 128))
        NR = R // tm
        grid = (B, NR)
        dims = ("parallel", "parallel")

        x4 = input.reshape(B, 2, R, 128)             # free view, no copies
        inputs += [x4, x4, target.reshape(B, R, 128)]
        in_specs += [
            pl.BlockSpec((None, None, tm, 128), lambda b, r: (b, 0, r, 0)),
            pl.BlockSpec((None, None, tm, 128), lambda b, r: (b, 1, r, 0)),
            pl.BlockSpec((None, tm, 128), lambda b, r: (b, r, 0)),
        ]
        if has_mask:
            inputs.append(mask.reshape(B, R, 128))   # Cm == C (or C == 1)
            in_specs.append(
                pl.BlockSpec((None, tm, 128), lambda b, r: (b, r, 0)))

        if want_loss:
            out_shapes.append(jax.ShapeDtypeStruct((B, R, 128), input.dtype))
            out_specs.append(
                pl.BlockSpec((None, tm, 128), lambda b, r: (b, r, 0)))
        if want_sum:
            out_shapes.append(
                jax.ShapeDtypeStruct((B * NR, 8, 128), jnp.float32))
            out_specs.append(pl.BlockSpec(
                (None, 8, 128), lambda b, r: (b * NR + r, 0, 0)))
        kernel_kwargs["tile_acc"] = True
    else:
        # ---- structured path: C on sublanes, H*W on lanes (broadcast mask or
        # non-tileable flattened extent). Channel tile first, spatial tile
        # grows to fill the block budget. ----
        if K % 128 == 0:
            tc = _pick_tile(C, unit, 8 * unit)
            cap_tk = max(128, (target_elems // max(tc, 8)) // 128 * 128)
            tk = _pick_tile(K, 128, cap_tk)
        else:
            # K not lane-divisible: block spans all of K; bound tc instead.
            # TODO(synk): pad K to a multiple of 128 to keep stores lane-dense
            # for large non-128-divisible spatial extents.
            tk = K
            tc = _pick_tile(C, unit, max(unit, target_elems // max(K, 1)))
        NC, NK = C // tc, K // tk
        grid = (B, NC, NK)
        dims = ("parallel", "parallel", "parallel")

        x4 = input.reshape(B, 2, C, K)               # free view, no copies
        inputs += [x4, x4, target.reshape(B, C, K)]
        in_specs += [
            pl.BlockSpec((None, None, tc, tk), lambda b, ci, ki: (b, 0, ci, ki)),
            pl.BlockSpec((None, None, tc, tk), lambda b, ci, ki: (b, 1, ci, ki)),
            pl.BlockSpec((None, tc, tk), lambda b, ci, ki: (b, ci, ki)),
        ]
        if has_mask:
            inputs.append(mask.reshape(B, Cm, K))
            if Cm == C:
                in_specs.append(
                    pl.BlockSpec((None, tc, tk), lambda b, ci, ki: (b, ci, ki)))
            else:
                in_specs.append(
                    pl.BlockSpec((None, 1, tk), lambda b, ci, ki: (b, 0, ki)))

        if want_loss:
            out_shapes.append(jax.ShapeDtypeStruct((B, C, K), input.dtype))
            out_specs.append(
                pl.BlockSpec((None, tc, tk), lambda b, ci, ki: (b, ci, ki)))
        if want_sum:
            out_shapes.append(
                jax.ShapeDtypeStruct((B * NC * NK, 8, 128), jnp.float32))
            out_specs.append(pl.BlockSpec(
                (None, 8, 128),
                lambda b, ci, ki: ((b * NC + ci) * NK + ki, 0, 0)))
        kernel_kwargs["tile_acc"] = False

    kernel = functools.partial(_laplacian_nll_kernel, **kernel_kwargs)

    outs = pl.pallas_call(
        kernel,
        out_shape=tuple(out_shapes),
        grid_spec=pltpu.PrefetchScalarGridSpec(
            num_scalar_prefetch=0,
            grid=grid,
            in_specs=in_specs,
            out_specs=tuple(out_specs),
        ),
        compiler_params=pltpu.CompilerParams(
            dimension_semantics=dims,
            vmem_limit_bytes=vmem_limit,
        ),
    )(*inputs)

    if reduce_mean:
        # Tiny final reduction over the per-step partial blocks in f32.
        total = jnp.sum(outs[0].astype(jnp.float32))
        # Matches torch.mean: divide by the total element count, mask or not.
        return total / jnp.float32(B * C * K)
    return outs[0].reshape(B, C, H, W)


def _reference(input, target, mask=None, reduce_mean=True,
               eps_min=1e-5, eps_max=1000.0):
    C = input.shape[1] // 2
    y_hat, log_scale = input[:, :C], input[:, C:]
    diff = y_hat - target
    scale = jnp.clip(jnp.exp(log_scale), eps_min, eps_max)
    loss = jnp.log(scale) + jnp.abs(diff) / scale
    if mask is not None:
        loss = loss * mask
    return jnp.mean(loss) if reduce_mean else loss


if __name__ == "__main__":
    key = jax.random.PRNGKey(0)
    k1, k2, k3 = jax.random.split(key, 3)

    B, C, H, W = 2, 4, 16, 16
    x = jax.random.normal(k1, (B, 2 * C, H, W), jnp.float32)   # mean | log-scale
    y = jax.random.normal(k2, (B, C, H, W), jnp.float32)
    m = (jax.random.uniform(k3, (B, 1, H, W)) > 0.3).astype(jnp.float32)

    # 1) reduce_mean=True, with broadcast mask (structured path)
    out = laplacian_nll(x, y, mask=m, reduce_mean=True)
    jax.block_until_ready(out)
    ref = _reference(x, y, mask=m, reduce_mean=True)
    assert jnp.allclose(out, ref, rtol=1e-5, atol=1e-5), (out, ref)

    # 2) reduce_mean=True, no mask (flat path, tile accumulator)
    out = laplacian_nll(x, y, mask=None, reduce_mean=True)
    jax.block_until_ready(out)
    ref = _reference(x, y, mask=None, reduce_mean=True)
    assert jnp.allclose(out, ref, rtol=1e-5, atol=1e-5), (out, ref)

    # 3) reduce_mean=False, with broadcast mask (structured path)
    out = laplacian_nll(x, y, mask=m, reduce_mean=False)
    jax.block_until_ready(out)
    ref = _reference(x, y, mask=m, reduce_mean=False)
    assert out.shape == (B, C, H, W)
    assert jnp.allclose(out, ref, rtol=1e-5, atol=1e-5)

    # 4) reduce_mean=False, no mask (flat path)
    out = laplacian_nll(x, y, mask=None, reduce_mean=False)
    jax.block_until_ready(out)
    ref = _reference(x, y, mask=None, reduce_mean=False)
    assert out.shape == (B, C, H, W)
    assert jnp.allclose(out, ref, rtol=1e-5, atol=1e-5)

    print("KERNEL_OK")
</pallas_src>

<mosaic_0001>
module attributes {stable_mosaic.version = 11 : i64} {
  func.func @_laplacian_nll_kernel(%arg0: i32, %arg1: i32, %arg2: i32, %arg3: memref<1x1x4x256xf32, #tpu.memory_space<vmem>>, %arg4: memref<1x1x4x256xf32, #tpu.memory_space<vmem>>, %arg5: memref<1x4x256xf32, #tpu.memory_space<vmem>>, %arg6: memref<1x1x256xf32, #tpu.memory_space<vmem>>, %arg7: memref<1x8x128xf32, #tpu.memory_space<vmem>>) attributes {dimension_semantics = [#tpu.dimension_semantics<parallel>, #tpu.dimension_semantics<parallel>, #tpu.dimension_semantics<parallel>], iteration_bounds = array<i64: 2, 1, 1>, scalar_prefetch = 0 : i64, scratch_operands = 0 : i64, tpu.core_type = #tpu.core_type<tc>, window_params = [{transform_indices = @transform_0, window_bounds = array<i64: 1, 1, 4, 256>}, {transform_indices = @transform_1, window_bounds = array<i64: 1, 1, 4, 256>}, {transform_indices = @transform_2, window_bounds = array<i64: 1, 4, 256>}, {transform_indices = @transform_3, window_bounds = array<i64: 1, 1, 256>}, {transform_indices = @transform_4, window_bounds = array<i64: 1, 8, 128>}]} {
    %c0 = arith.constant 0 : index
    %c0_0 = arith.constant 0 : index
    %c0_1 = arith.constant 0 : index
    %c0_2 = arith.constant 0 : index
    %0 = vector.load %arg3[%c0, %c0_0, %c0_1, %c0_2] : memref<1x1x4x256xf32, #tpu.memory_space<vmem>>, vector<1x1x4x256xf32>
    %1 = vector.shape_cast %0 : vector<1x1x4x256xf32> to vector<4x256xf32>
    %c0_3 = arith.constant 0 : index
    %c0_4 = arith.constant 0 : index
    %c0_5 = arith.constant 0 : index
    %c0_6 = arith.constant 0 : index
    %2 = vector.load %arg4[%c0_3, %c0_4, %c0_5, %c0_6] : memref<1x1x4x256xf32, #tpu.memory_space<vmem>>, vector<1x1x4x256xf32>
    %3 = vector.shape_cast %2 : vector<1x1x4x256xf32> to vector<4x256xf32>
    %c0_7 = arith.constant 0 : index
    %c0_8 = arith.constant 0 : index
    %c0_9 = arith.constant 0 : index
    %4 = vector.load %arg5[%c0_7, %c0_8, %c0_9] : memref<1x4x256xf32, #tpu.memory_space<vmem>>, vector<1x4x256xf32>
    %5 = vector.shape_cast %4 : vector<1x4x256xf32> to vector<4x256xf32>
    %cst = arith.constant -11.5129251 : f32
    %cst_10 = arith.constant 6.90775537 : f32
    %6 = vector.broadcast %cst : f32 to vector<4x256xf32>
    %7 = arith.maximumf %6, %3 : vector<4x256xf32>
    %8 = vector.broadcast %cst_10 : f32 to vector<4x256xf32>
    %9 = arith.minimumf %8, %7 : vector<4x256xf32>
    %10 = math.exp %9 : vector<4x256xf32>
    %11 = arith.subf %1, %5 : vector<4x256xf32>
    %12 = math.absf %11 : vector<4x256xf32>
    %13 = arith.divf %12, %10 : vector<4x256xf32>
    %14 = arith.addf %9, %13 : vector<4x256xf32>
    %c0_11 = arith.constant 0 : index
    %c0_12 = arith.constant 0 : index
    %c0_13 = arith.constant 0 : index
    %15 = vector.load %arg6[%c0_11, %c0_12, %c0_13] : memref<1x1x256xf32, #tpu.memory_space<vmem>>, vector<1x1x256xf32>
    %16 = vector.shape_cast %15 : vector<1x1x256xf32> to vector<1x256xf32>
    %17 = vector.broadcast %16 : vector<1x256xf32> to vector<4x256xf32>
    %18 = arith.mulf %14, %17 : vector<4x256xf32>
    %19 = vector.shape_cast %18 : vector<4x256xf32> to vector<1x4x256xf32>
    %cst_14 = arith.constant dense<0.000000e+00> : vector<1xf32>
    %20 = vector.multi_reduction <add>, %19, %cst_14 [1, 2] : vector<1x4x256xf32> to vector<1xf32>
    %21 = vector.shape_cast %20 : vector<1xf32> to vector<1x1x1xf32>
    %22 = vector.extract %21[0, 0, 0] : f32 from vector<1x1x1xf32>
    %23 = tpu.iota {dimensions = array<i32: 0>} : vector<8x128xi32>
    %24 = tpu.iota {dimensions = array<i32: 1>} : vector<8x128xi32>
    %c0_i32 = arith.constant 0 : i32
    %25 = vector.broadcast %c0_i32 : i32 to vector<8x128xi32>
    %26 = arith.cmpi eq, %23, %25 : vector<8x128xi32>
    %c0_i32_15 = arith.constant 0 : i32
    %27 = vector.broadcast %c0_i32_15 : i32 to vector<8x128xi32>
    %28 = arith.cmpi eq, %24, %27 : vector<8x128xi32>
    %29 = arith.andi %26, %28 : vector<8x128xi1>
    %cst_16 = arith.constant 0.000000e+00 : f32
    %30 = vector.broadcast %cst_16 : f32 to vector<8x128xf32>
    %31 = vector.broadcast %22 : f32 to vector<8x128xf32>
    %32 = arith.select %29, %31, %30 : vector<8x128xi1>, vector<8x128xf32>
    %c0_17 = arith.constant 0 : index
    %c0_18 = arith.constant 0 : index
    %c0_19 = arith.constant 0 : index
    %33 = vector.load %arg7[%c0_17, %c0_18, %c0_19] : memref<1x8x128xf32, #tpu.memory_space<vmem>>, vector<1x8x128xf32>
    %34 = vector.shape_cast %33 : vector<1x8x128xf32> to vector<8x128xf32>
    %35 = vector.shape_cast %32 : vector<8x128xf32> to vector<1x8x128xf32>
    tpu.vector_store %arg7[%c0_17, %c0_18, %c0_19], %35 {strides = array<i32>} : memref<1x8x128xf32, #tpu.memory_space<vmem>>, vector<1x8x128xf32>,
    return
  }
  func.func @transform_0(%arg0: i32, %arg1: i32, %arg2: i32) -> (i32, i32, i32, i32) {
    %c0_i32 = arith.constant 0 : i32
    %c0_i32_0 = arith.constant 0 : i32
    return %arg0, %c0_i32, %arg1, %arg2 : i32, i32, i32, i32
  }
  func.func @transform_1(%arg0: i32, %arg1: i32, %arg2: i32) -> (i32, i32, i32, i32) {
    %c1_i32 = arith.constant 1 : i32
    %c0_i32 = arith.constant 0 : i32
    return %arg0, %c1_i32, %arg1, %arg2 : i32, i32, i32, i32
  }
  func.func @transform_2(%arg0: i32, %arg1: i32, %arg2: i32) -> (i32, i32, i32) {
    %c0_i32 = arith.constant 0 : i32
    return %arg0, %arg1, %arg2 : i32, i32, i32
  }
  func.func @transform_3(%arg0: i32, %arg1: i32, %arg2: i32) -> (i32, i32, i32) {
    %c0_i32 = arith.constant 0 : i32
    %c0_i32_0 = arith.constant 0 : i32
    return %arg0, %c0_i32, %arg2 : i32, i32, i32
  }
  func.func @transform_4(%arg0: i32, %arg1: i32, %arg2: i32) -> (i32, i32, i32) {
    %c1_i32 = arith.constant 1 : i32
    %0 = arith.muli %arg0, %c1_i32 : i32
    %1 = arith.addi %0, %arg1 : i32
    %c1_i32_0 = arith.constant 1 : i32
    %2 = arith.muli %1, %c1_i32_0 : i32
    %3 = arith.addi %2, %arg2 : i32
    %c0_i32 = arith.constant 0 : i32
    %c0_i32_1 = arith.constant 0 : i32
    %c0_i32_2 = arith.constant 0 : i32
    return %3, %c0_i32, %c0_i32_1 : i32, i32, i32
  }
}

</mosaic_0001>

<llo_original>
// kernel: tpu_custom_call.1
$region0: #{tpu_custom_call.1}
  #allocation0 [shape = 'u32[]', space=smem, size = 0x4, offset = 0x4, fixed_abs, tag = 'smem constant byte address 0x4 - core index']
  #allocation1 [shape = 'u32[144,128]{1,0:T(1,128)}', space=vmem, size = 0x12000, scoped, tag = 'internal scratch']
  %s0 = inlined_call_operand.hbm [shape: f32[2,2,4,256], index: 0, kind: input, shape index: {}]
  %s1 = inlined_call_operand.hbm [shape: f32[2,2,4,256], index: 1, kind: input, shape index: {}]
  %s2 = inlined_call_operand.hbm [shape: f32[2,4,256], index: 2, kind: input, shape index: {}]
  %s3 = inlined_call_operand.vmem [shape: f32[2,1,256], index: 3, kind: input, shape index: {}]
  %s4 = inlined_call_operand.hbm [shape: f32[2,8,128], index: 4, kind: output, shape index: {}]
  %s5 = sld [smem:[#allocation0]]
  $region61: #{tpu_custom_call.1} parent=0
    _
  %s7 = ssub.s32 1, %s5
  %s8 = scalar_select 0, %s7, %s5
  $region1: #{tpu_custom_call.1} parent=0
    #allocation2 [shape = 'u8[8192]{0}', space=vmem, size = 0x2000, scoped, tag = 'input window, operand 0']
    #allocation3 [shape = 's32[2]{0}', space=sflag, size = 0x8, scoped, tag = 'scoped memory for tpu_custom_call.1']
    #allocation4 [shape = 's32[2]{0}', space=sflag, size = 0x8, scoped, tag = 'scoped memory for tpu_custom_call.1']
    #allocation5 [shape = 'u8[8192]{0}', space=vmem, size = 0x2000, scoped, tag = 'input window, operand 1']
    #allocation6 [shape = 's32[2]{0}', space=sflag, size = 0x8, scoped, tag = 'scoped memory for tpu_custom_call.1']
    #allocation7 [shape = 'u8[8192]{0}', space=vmem, size = 0x2000, scoped, tag = 'input window, operand 2']
    #allocation8 [shape = 'u8[8192]{0}', space=vmem, size = 0x2000, scoped, tag = 'output window, operand 0']
    %9 = vsyncpa [#allocation3], 0
    %s10 = scalar_lea.sflag [#allocation3], 1
    %11 = vsyncpa %s10, 0
    %12 = vsyncpa [#allocation6], 0
    %s13 = scalar_lea.sflag [#allocation6], 1
    %14 = vsyncpa %s13, 0
    %15 = vsyncpa [#allocation4], 0
    %s16 = scalar_lea.sflag [#allocation4], 1
    %17 = vsyncpa %s16, 0
    loop: start=0, step=1, limit=4
    $region2: #{tpu_custom_call.1} parent=1 // loop_pre_header
      _
    $region3: #{tpu_custom_call.1} parent=1 // loop_header
      %s19 = sphi 0, %s23
      %p20 = scmp.ge.s32.totalorder %s19, 4
      %s26 = sphi 0, %s45
      %s27 = sphi 0, %s41
      %s28 = sphi 0, %s37
      %s29 = sphi 0, %s26
      %s30 = sphi 0, %s27
      %s31 = sphi 0, %s28
      %s32 = sphi 0, %s29
      %s33 = sphi 0, %s30
      %s34 = sphi 0, %s31
      %s52 = sphi 0, %s54
      %s55 = sphi 0, %s52
      %s56 = sphi 0, %s55
      %s72 = sphi 0, %s56
      %s82 = sphi 0, %s84
      %s85 = sphi 0, %s82
      %s86 = sphi 0, %s85
      %s102 = sphi 0, %s86
      %s112 = sphi 0, %s114
      %s115 = sphi 0, %s112
      %s116 = sphi 0, %s115
      %s132 = sphi 0, %s116
      %s140 = sphi 0, %s142
      %s143 = sphi 0, %s140
      %s144 = sphi 0, %s143
      %s160 = sphi 0, %s144
      %s170 = sphi 0, %s172
      %s173 = sphi 0, %s170
      %s174 = sphi 0, %s173
      %s190 = sphi 0, %s174
    $region4: #{tpu_custom_call.1} parent=1 // loop_header_branch
      %22 = sbr.rel (%p20) target = $region8
    $region5: #{tpu_custom_call.1} parent=1 // loop_body
      %s24 = ssub.s32 %s19, 1
      %s25 = ssub.s32 %s19, 2
      %s35 = sadd.s32 1, %s28
      %p36 = scmp.ge.s32.totalorder %s35, 1
      %s37 = scalar_select %p36, 0, %s35
      %s38 = sadd.s32 1, %s27
      %s39 = scalar_select %p36, %s38, %s27
      %p40 = scmp.ge.s32.totalorder %s39, 1
      %s41 = scalar_select %p40, 0, %s39
      %s42 = sadd.s32 1, %s26
      %s43 = scalar_select %p40, %s42, %s26
      %p44 = scmp.ge.s32.totalorder %s43, 2
      %s45 = scalar_select %p44, 0, %s43
      %s46 = ssub.s32 %s26, %s45
      %s47 = ssub.s32 %s27, %s41
      %s48 = sor.u32 %s46, %s47
      %s49 = ssub.s32 %s28, %s37
      %s50 = sor.u32 %s48, %s49
      %p51 = scmp.eq.s32.totalorder %s50, 0
      %s53 = sadd.s32 %s52, 1
      %s54 = scalar_select %p51, %s52, %s53
      %p57 = pneg %p51
      %p58 = scmp.eq.s32.totalorder %s19, 1
      %p59 = por %p57, %p58
      %p60 = scmp.ne.s32.totalorder %s52, %s55
      %p61 = scmp.eq.s32.totalorder %s19, 0
      %p62 = por %p60, %p61
      %p63 = scmp.ne.s32.totalorder %s52, %s55
      %p64 = scmp.eq.s32.totalorder %s24, 1
      %p65 = por %p63, %p64
      %p66 = scmp.ne.s32.totalorder %s55, %s56
      %p67 = scmp.eq.s32.totalorder %s24, 0
      %p68 = por %p66, %p67
      %p69 = scmp.ne.s32.totalorder %s55, %s56
      %p70 = scmp.eq.s32.totalorder %s25, 1
      %p71 = por %p69, %p70
      %p73 = scmp.ne.s32.totalorder %s56, %s72
      %p74 = scmp.eq.s32.totalorder %s25, 0
      %p75 = por %p73, %p74
      %s76 = ssub.s32 %s26, %s45
      %s77 = ssub.s32 %s27, %s41
      %s78 = sor.u32 %s76, %s77
      %s79 = ssub.s32 %s28, %s37
      %s80 = sor.u32 %s78, %s79
      %p81 = scmp.eq.s32.totalorder %s80, 0
      %s83 = sadd.s32 %s82, 1
      %s84 = scalar_select %p81, %s82, %s83
      %p87 = pneg %p81
      %p88 = scmp.eq.s32.totalorder %s19, 1
      %p89 = por %p87, %p88
      %p90 = scmp.ne.s32.totalorder %s82, %s85
      %p91 = scmp.eq.s32.totalorder %s19, 0
      %p92 = por %p90, %p91
      %p93 = scmp.ne.s32.totalorder %s82, %s85
      %p94 = scmp.eq.s32.totalorder %s24, 1
      %p95 = por %p93, %p94
      %p96 = scmp.ne.s32.totalorder %s85, %s86
      %p97 = scmp.eq.s32.totalorder %s24, 0
      %p98 = por %p96, %p97
      %p99 = scmp.ne.s32.totalorder %s85, %s86
      %p100 = scmp.eq.s32.totalorder %s25, 1
      %p101 = por %p99, %p100
      %p103 = scmp.ne.s32.totalorder %s86, %s102
      %p104 = scmp.eq.s32.totalorder %s25, 0
      %p105 = por %p103, %p104
      %s106 = ssub.s32 %s26, %s45
      %s107 = ssub.s32 %s27, %s41
      %s108 = sor.u32 %s106, %s107
      %s109 = ssub.s32 %s28, %s37
      %s110 = sor.u32 %s108, %s109
      %p111 = scmp.eq.s32.totalorder %s110, 0
      %s113 = sadd.s32 %s112, 1
      %s114 = scalar_select %p111, %s112, %s113
      %p117 = pneg %p111
      %p118 = scmp.eq.s32.totalorder %s19, 1
      %p119 = por %p117, %p118
      %p120 = scmp.ne.s32.totalorder %s112, %s115
      %p121 = scmp.eq.s32.totalorder %s19, 0
      %p122 = por %p120, %p121
      %p123 = scmp.ne.s32.totalorder %s112, %s115
      %p124 = scmp.eq.s32.totalorder %s24, 1
      %p125 = por %p123, %p124
      %p126 = scmp.ne.s32.totalorder %s115, %s116
      %p127 = scmp.eq.s32.totalorder %s24, 0
      %p128 = por %p126, %p127
      %p129 = scmp.ne.s32.totalorder %s115, %s116
      %p130 = scmp.eq.s32.totalorder %s25, 1
      %p131 = por %p129, %p130
      %p133 = scmp.ne.s32.totalorder %s116, %s132
      %p134 = scmp.eq.s32.totalorder %s25, 0
      %p135 = por %p133, %p134
      %s136 = ssub.s32 %s26, %s45
      %s137 = ssub.s32 %s28, %s37
      %s138 = sor.u32 %s136, %s137
      %p139 = scmp.eq.s32.totalorder %s138, 0
      %s141 = sadd.s32 %s140, 1
      %s142 = scalar_select %p139, %s140, %s141
      %p145 = pneg %p139
      %p146 = scmp.eq.s32.totalorder %s19, 1
      %p147 = por %p145, %p146
      %p148 = scmp.ne.s32.totalorder %s140, %s143
      %p149 = scmp.eq.s32.totalorder %s19, 0
      %p150 = por %p148, %p149
      %p151 = scmp.ne.s32.totalorder %s140, %s143
      %p152 = scmp.eq.s32.totalorder %s24, 1
      %p153 = por %p151, %p152
      %p154 = scmp.ne.s32.totalorder %s143, %s144
      %p155 = scmp.eq.s32.totalorder %s24, 0
      %p156 = por %p154, %p155
      %p157 = scmp.ne.s32.totalorder %s143, %s144
      %p158 = scmp.eq.s32.totalorder %s25, 1
      %p159 = por %p157, %p158
      %p161 = scmp.ne.s32.totalorder %s144, %s160
      %p162 = scmp.eq.s32.totalorder %s25, 0
      %p163 = por %p161, %p162
      %s164 = sadd.s32 %s26, %s27
      %s165 = sadd.s32 %s164, %s28
      %s166 = sadd.s32 %s45, %s41
      %s167 = sadd.s32 %s166, %s37
      %s168 = ssub.s32 %s165, %s167
      %p169 = scmp.eq.s32.totalorder %s168, 0
      %s171 = sadd.s32 %s170, 1
      %s172 = scalar_select %p169, %s170, %s171
      %p175 = pneg %p169
      %p176 = scmp.eq.s32.totalorder %s19, 1
      %p177 = por %p175, %p176
      %p178 = scmp.ne.s32.totalorder %s170, %s173
      %p179 = scmp.eq.s32.totalorder %s19, 0
      %p180 = por %p178, %p179
      %p181 = scmp.ne.s32.totalorder %s170, %s173
      %p182 = scmp.eq.s32.totalorder %s24, 1
      %p183 = por %p181, %p182
      %p184 = scmp.ne.s32.totalorder %s173, %s174
      %p185 = scmp.eq.s32.totalorder %s24, 0
      %p186 = por %p184, %p185
      %p187 = scmp.ne.s32.totalorder %s173, %s174
      %p188 = scmp.eq.s32.totalorder %s25, 1
      %p189 = por %p187, %p188
      %p191 = scmp.ne.s32.totalorder %s174, %s190
      %p192 = scmp.eq.s32.totalorder %s25, 0
      %p193 = por %p191, %p192
      %p194 = scmp.le.s32.totalorder 1, %s19
      %p195 = scmp.lt.s32.totalorder %s19, 3
      %p196 = pnand %p194, %p195
      %p197 = pneg %p196
      // Predicated region
      $region9: #{tpu_custom_call.1} parent=5 // pred_check
        _
      $region10: #{tpu_custom_call.1} parent=5 // pred_check_branch
        %199 = sbr.rel (%p196) target = $region12
      $region11: #{tpu_custom_call.1} parent=5 // pred_region
        %s200 = ssub.s32 %s19, 1
      $region12: #{tpu_custom_call.1} parent=5 // pred_fallthru
        _
      %p201 = scmp.lt.s32.totalorder %s19, 2
      // Predicated region
      $region13: #{tpu_custom_call.1} parent=5 // pred_check
        %p202 = pneg %p201
      $region14: #{tpu_custom_call.1} parent=5 // pred_check_branch
        %204 = sbr.rel (%p202) target = $region16
      $region15: #{tpu_custom_call.1} parent=5 // pred_region
        // Predicated region
        $region17: #{tpu_custom_call.1} parent=15 // pred_check
          %p205 = pneg %p62
        $region18: #{tpu_custom_call.1} parent=15 // pred_check_branch
          %207 = sbr.rel (%p205) target = $region20
        $region19: #{tpu_custom_call.1} parent=15 // pred_region
          %s208 = sand.u32 %s52, 1
          %s209 = scalar_lea.sflag [#allocation3], %s208
          %s210 = sand.u32 %s52, 1
          %s211 = smul.addr %s210, 8
          %s212 = scalar_lea.vmem [#allocation2], %s211
          %s213 = smul.u32 2, %s28
          %s215 = ssub.s32 128, 128
          %216 = vsyncadd %s209, %s215
          %s217 = smul.addr %s27, 2
          %s218 = sadd.s32 %s213, %s217
          %s219 = smul.addr %s26, 4
          %s220 = sadd.s32 %s218, %s219
          %s221 = smul.addr %s220, 64
          %s222 = scalar_lea.hbm %s0, %s221
          %s224 = sshll.u32 %s212, 4
          %s225 = int_to_ptr.vmem [resolvable:$true] %s224
          %227 = dma.hbm_to_vmem [thread:$0]  %s222, 128, %s225, %s209
        $region20: #{tpu_custom_call.1} parent=15 // pred_fallthru
          _
        // Predicated region
        $region21: #{tpu_custom_call.1} parent=15 // pred_check
          %p228 = pneg %p92
        $region22: #{tpu_custom_call.1} parent=15 // pred_check_branch
          %230 = sbr.rel (%p228) target = $region24
        $region23: #{tpu_custom_call.1} parent=15 // pred_region
          %s231 = sand.u32 %s19, 1
          %s232 = scalar_lea.sflag [#allocation6], %s231
          %s233 = sand.u32 %s82, 1
          %s234 = smul.addr %s233, 8
          %s235 = scalar_lea.vmem [#allocation5], %s234
          %s236 = smul.u32 2, %s28
          %s238 = ssub.s32 128, 128
          %239 = vsyncadd %s232, %s238
          %s240 = smul.addr %s27, 2
          %s241 = sadd.s32 %s236, %s240
          %s242 = sadd.s32 %s241, 2
          %s243 = smul.addr %s26, 4
          %s244 = sadd.s32 %s242, %s243
          %s245 = smul.addr %s244, 64
          %s246 = scalar_lea.hbm %s1, %s245
          %s248 = sshll.u32 %s235, 4
          %s249 = int_to_ptr.vmem [resolvable:$true] %s248
          %251 = dma.hbm_to_vmem [thread:$0]  %s246, 128, %s249, %s232
        $region24: #{tpu_custom_call.1} parent=15 // pred_fallthru
          _
        // Predicated region
        $region25: #{tpu_custom_call.1} parent=15 // pred_check
          %p252 = pneg %p122
        $region26: #{tpu_custom_call.1} parent=15 // pred_check_branch
          %254 = sbr.rel (%p252) target = $region28
        $region27: #{tpu_custom_call.1} parent=15 // pred_region
          %s255 = sand.u32 %s19, 1
          %s256 = scalar_lea.sflag [#allocation6], %s255
          %s257 = sand.u32 %s112, 1
          %s258 = smul.addr %s257, 8
          %s259 = scalar_lea.vmem [#allocation7], %s258
          %s260 = smul.u32 2, %s28
          %s262 = ssub.s32 128, 128
          %263 = vsyncadd %s256, %s262
          %s264 = smul.addr %s27, 2
          %s265 = sadd.s32 %s260, %s264
          %s266 = smul.addr %s26, 2
          %s267 = sadd.s32 %s265, %s266
          %s268 = smul.addr %s267, 64
          %s269 = scalar_lea.hbm %s2, %s268
          %s271 = sshll.u32 %s259, 4
          %s272 = int_to_ptr.vmem [resolvable:$true] %s271
          %274 = dma.hbm_to_vmem [thread:$0]  %s269, 128, %s272, %s256
        $region28: #{tpu_custom_call.1} parent=15 // pred_fallthru
          _
        // Predicated region
        $region29: #{tpu_custom_call.1} parent=15 // pred_check
          %p275 = pneg %p150
        $region30: #{tpu_custom_call.1} parent=15 // pred_check_branch
          %277 = sbr.rel (%p275) target = $region32
        $region31: #{tpu_custom_call.1} parent=15 // pred_region
          %s278 = smul.u32 2, %s28
          %p279 = scmp.lt.s32.totalorder %s26, 1
          %s280 = scalar_select %p279, %s26, 1
          %p281 = scmp.lt.s32.totalorder %s278, 1
          %s282 = scalar_select %p281, %s278, 1
          %s283 = smul.addr %s280, 2
          %s284 = sadd.s32 %s282, %s283
          %s285 = scalar_lea.vmem %s3, %s284
          %s286 = smul.u32 2, %s28
        $region32: #{tpu_custom_call.1} parent=15 // pred_fallthru
          _
      $region16: #{tpu_custom_call.1} parent=5 // pred_fallthru
        _
      %p287 = scmp.le.s32.totalorder 1, %s19
      %p288 = scmp.lt.s32.totalorder %s19, 3
      %p289 = pnand %p287, %p288
      %p290 = pneg %p289
      // Predicated region
      $region33: #{tpu_custom_call.1} parent=5 // pred_check
        _
      $region34: #{tpu_custom_call.1} parent=5 // pred_check_branch
        %292 = sbr.rel (%p289) target = $region36
      $region35: #{tpu_custom_call.1} parent=5 // pred_region
        %s293 = ssub.s32 %s19, 1
        %s294 = sand.u32 %s55, 1
        %s295 = scalar_lea.sflag [#allocation3], %s294
        %s296 = sand.u32 %s55, 1
        %s297 = smul.addr %s296, 8
        %s298 = scalar_lea.vmem [#allocation2], %s297
        // Predicated region
        $region37: #{tpu_custom_call.1} parent=35 // pred_check
          %p299 = pneg %p68
        $region38: #{tpu_custom_call.1} parent=35 // pred_check_branch
          %301 = sbr.rel (%p299) target = $region40
        $region39: #{tpu_custom_call.1} parent=35 // pred_region
          %302 = dma.done %s295, 128
        $region40: #{tpu_custom_call.1} parent=35 // pred_fallthru
          _
        %s303 = sand.u32 %s24, 1
        %s304 = scalar_lea.sflag [#allocation6], %s303
        %s305 = sand.u32 %s85, 1
        %s306 = smul.addr %s305, 8
        %s307 = scalar_lea.vmem [#allocation5], %s306
        // Predicated region
        $region41: #{tpu_custom_call.1} parent=35 // pred_check
          %p308 = pneg %p98
        $region42: #{tpu_custom_call.1} parent=35 // pred_check_branch
          %310 = sbr.rel (%p308) target = $region44
        $region43: #{tpu_custom_call.1} parent=35 // pred_region
          %311 = dma.done %s304, 128
        $region44: #{tpu_custom_call.1} parent=35 // pred_fallthru
          _
        %s312 = sand.u32 %s24, 1
        %s313 = scalar_lea.sflag [#allocation6], %s312
        %s314 = sand.u32 %s115, 1
        %s315 = smul.addr %s314, 8
        %s316 = scalar_lea.vmem [#allocation7], %s315
        // Predicated region
        $region45: #{tpu_custom_call.1} parent=35 // pred_check
          %p317 = pneg %p128
        $region46: #{tpu_custom_call.1} parent=35 // pred_check_branch
          %319 = sbr.rel (%p317) target = $region48
        $region47: #{tpu_custom_call.1} parent=35 // pred_region
          %320 = dma.done %s313, 128
        $region48: #{tpu_custom_call.1} parent=35 // pred_fallthru
          _
        %s321 = sand.u32 %s55, 1
        %s322 = scalar_lea.sflag [#allocation3], %s321
        %s323 = sand.u32 %s55, 1
        %s324 = smul.addr %s323, 8
        %s325 = scalar_lea.vmem [#allocation2], %s324
        %p326 = pneg %p68
        %p327 = pneg %p65
        %s328 = sand.u32 %s24, 1
        %s329 = scalar_lea.sflag [#allocation6], %s328
        %s330 = sand.u32 %s85, 1
        %s331 = smul.addr %s330, 8
        %s332 = scalar_lea.vmem [#allocation5], %s331
        %p333 = pneg %p98
        %p334 = pneg %p95
        %s335 = sand.u32 %s24, 1
        %s336 = scalar_lea.sflag [#allocation6], %s335
        %s337 = sand.u32 %s115, 1
        %s338 = smul.addr %s337, 8
        %s339 = scalar_lea.vmem [#allocation7], %s338
        %p340 = pneg %p128
        %p341 = pneg %p125
        %s342 = smul.u32 2, %s31
        %p343 = scmp.lt.s32.totalorder %s29, 1
        %s344 = scalar_select %p343, %s29, 1
        %p345 = scmp.lt.s32.totalorder %s342, 1
        %s346 = scalar_select %p345, %s342, 1
        %s347 = smul.addr %s344, 2
        %s348 = sadd.s32 %s346, %s347
        %s349 = scalar_lea.vmem %s3, %s348
        %p350 = pneg %p156
        %p351 = pneg %p153
        %p352 = pneg %p186
        %p353 = pneg %p183
        %s354 = sand.u32 %s173, 1
        %s355 = scalar_lea.sflag [#allocation4], %s354
        %s356 = sand.u32 %s173, 1
        %s357 = smul.addr %s356, 8
        %s358 = scalar_lea.vmem [#allocation8], %s357
        %s359 = smul.u32 2, %s31
        %s360 = smul.u32 2, %s31
        %s361 = smul.u32 2, %s31
        %s362 = smul.u32 2, %s31
        %p363 = scmp.lt.s32.totalorder %s29, 1
        %s364 = scalar_select %p363, %s29, 1
        %p365 = scmp.lt.s32.totalorder %s362, 1
        %s366 = scalar_select %p365, %s362, 1
        %s367 = smul.addr %s364, 2
        %s368 = sadd.s32 %s366, %s367
        %s369 = scalar_lea.vmem %s3, %s368
        %s370 = smul.u32 2, %s31
        %s371 = sadd.s32 %s29, %s30
        %s372 = sadd.s32 %s371, %s31
        %v373 = vld [vmem:[%s298] sm:$0xff]
        %v374 = vld [vmem:[%s307] sm:$0xff]
        %v375 = vld [vmem:[%s316] sm:$0xff]
        %v376 = vmax.f32 %v374, -11.512925
        %v377 = vmin.f32 %v376, 6.9077554
        %v378 = vmul.f32 %v377, 1.442695
        %v379 = vpow.pop %v378
        %v380 = vsub.f32 %v373, %v375
        %v381 = vand.u32 2147483647, %v380
        %v382 = vrcp.pop %v379
        %v383 = vmul.f32 %v381, %v382
        %v384 = vadd.f32 %v377, %v383
        %v385 = vld [vmem:[%s369] sm:$0x3]
        %v387 = vlaneseq
        %v388 = vshrl.u32 %v387, 7
        %v389 = vsub.s32 0, %v388
        %v390 = vrot.slane %v385, %v389
        %v391 = vlaneseq
        %v392 = vshrl.u32 %v391, 7
        %v393 = vsub.s32 1, %v392
        %v394 = vrot.slane %v385, %v393
        %v395 = vcombine.low %v390, %v394
        %v397 = vmul.f32 %v384, %v395
        %v399 = vcombine.high %v397, %v397
        %vm401 = vcmask 1043456
        %v402 = vsel %vm401, %v397, 0.0
        %v403 = vsel %vm401, %v399, 0.0
        %v404 = vadd.f32 %v402, %v403
        %405 = vadd.xlane.f32.xlu0 %v404
        %v406 = vpop.xlane.xlu0 %405
        %v407 = vrot.slane %v406, 4
        %v408 = vadd.f32 %v406, %v407
        %v409 = vrot.slane %v408, 2
        %v410 = vadd.f32 %v408, %v409
        %v411 = vrot.slane %v410, 1
        %v412 = vadd.f32 %v410, %v411
        %s413 = vtos %v412
        %v414 = vlaneseq
        %v415 = vshrl.u32 %v414, 7
        %v416 = vlaneseq
        %v417 = vand.u32 %v416, 127
        %vm418 = vcmp.eq.s32.totalorder %v415, 0
        %vm419 = vcmp.eq.s32.totalorder %v417, 0
        %vm420 = vmand %vm418, %vm419
        %v421 = vstv %s413
        %v422 = vsel %vm420, %v421, 0.0
        %423 = vst [vmem:[%s358] sm:$0xff] %v422
        %s424 = sand.u32 %s173, 1
        %s425 = scalar_lea.sflag [#allocation4], %s424
        %s426 = sand.u32 %s173, 1
        %s427 = smul.addr %s426, 8
        %s428 = scalar_lea.vmem [#allocation8], %s427
        // Predicated region
        $region49: #{tpu_custom_call.1} parent=35 // pred_check
          %p429 = pneg %p183
        $region50: #{tpu_custom_call.1} parent=35 // pred_check_branch
          %431 = sbr.rel (%p429) target = $region52
        $region51: #{tpu_custom_call.1} parent=35 // pred_region
          %s432 = sadd.s32 %s29, %s30
          %s433 = sadd.s32 %s432, %s31
          %s435 = ssub.s32 128, 128
          %436 = vsyncadd %s425, %s435
          %s437 = smul.addr %s433, 128
          %s438 = scalar_lea.hbm %s4, %s437
          %s440 = sshll.u32 %s428, 4
          %s441 = int_to_ptr.vmem [resolvable:$true] %s440
          %443 = dma.vmem_to_hbm [thread:$0]  %s441, 128, %s438, %s425
        $region52: #{tpu_custom_call.1} parent=35 // pred_fallthru
          _
      $region36: #{tpu_custom_call.1} parent=5 // pred_fallthru
        _
      %p444 = scmp.le.s32.totalorder 2, %s19
      // Predicated region
      $region53: #{tpu_custom_call.1} parent=5 // pred_check
        %p445 = pneg %p444
      $region54: #{tpu_custom_call.1} parent=5 // pred_check_branch
        %447 = sbr.rel (%p445) target = $region56
      $region55: #{tpu_custom_call.1} parent=5 // pred_region
        %s448 = ssub.s32 %s19, 2
        // Predicated region
        $region57: #{tpu_custom_call.1} parent=55 // pred_check
          %p449 = pneg %p189
        $region58: #{tpu_custom_call.1} parent=55 // pred_check_branch
          %451 = sbr.rel (%p449) target = $region60
        $region59: #{tpu_custom_call.1} parent=55 // pred_region
          %s452 = sand.u32 %s174, 1
          %s453 = scalar_lea.sflag [#allocation4], %s452
          %s454 = sand.u32 %s174, 1
          %s455 = smul.addr %s454, 8
          %s456 = scalar_lea.vmem [#allocation8], %s455
          %457 = dma.done %s453, 128
        $region60: #{tpu_custom_call.1} parent=55 // pred_fallthru
          _
      $region56: #{tpu_custom_call.1} parent=5 // pred_fallthru
        _
    $region6: #{tpu_custom_call.1} parent=1 // loop_footer
      %s23 = sadd.s32 1, %s19
    $region7: #{tpu_custom_call.1} parent=1 // loop_footer_branch
      %18 = sbr.rel target = $region3
    $region8: #{tpu_custom_call.1} parent=1 // loop_exit
      _
    %458 = vsyncpa [#allocation3], 1
    %s459 = scalar_lea.sflag [#allocation3], 1
    %460 = vsyncpa %s459, 1
    %461 = vsyncpa [#allocation6], 1
    %s462 = scalar_lea.sflag [#allocation6], 1
    %463 = vsyncpa %s462, 1
    %464 = vsyncpa [#allocation4], 1
    %s465 = scalar_lea.sflag [#allocation4], 1
    %466 = vsyncpa %s465, 1

</llo_original>
